<compile_context>
chip_gen: v5e
topology: v5e:2x2
jax: 0.10.0
libtpu: 0.0.40
codegen_flags: <defaults>
</compile_context>

<pallas_src>
import math

import jax
import jax.numpy as jnp
from jax.experimental import pallas as pl
from jax.experimental.pallas import tpu as pltpu

MIN_EXPERT_CAPACITY = 4


# ----------------------------------------------------------------------------
# Top2Gating (pure JAX glue; reproduces lucidrains Top2Gating forward, but
# emits dispatch/combine directly in expert-major layout)
# ----------------------------------------------------------------------------
def _cumsum_exclusive(t, axis):
    return jnp.cumsum(t, axis=axis) - t


def top2_gating(x, w_gating, key, *, num_gates, second_policy="random",
                second_threshold=0.2, capacity_factor=1.25, eps=1e-9,
                capacity_pad_multiple=8):
    """Returns (dispatch_e [E,B,Cp,N], combine_e [E,B,N,Cp], loss, idx1, idx2).

    The capacity axis is zero-padded up to a multiple of `capacity_pad_multiple`;
    padded slots are never routed to, so the MoE output is bit-identical to the
    unpadded formulation while giving the kernel sublane-aligned tiles.
    """
    b, group_size, _ = x.shape

    raw_gates = jax.nn.softmax(jnp.einsum("bnd,de->bne", x, w_gating), axis=-1)

    index_1 = jnp.argmax(raw_gates, axis=-1)
    gate_1 = jnp.max(raw_gates, axis=-1)
    mask_1 = jax.nn.one_hot(index_1, num_gates, dtype=raw_gates.dtype)
    density_1_proxy = raw_gates

    gates_without_top_1 = raw_gates * (1.0 - mask_1)
    index_2 = jnp.argmax(gates_without_top_1, axis=-1)
    gate_2 = jnp.max(gates_without_top_1, axis=-1)
    mask_2 = jax.nn.one_hot(index_2, num_gates, dtype=raw_gates.dtype)

    # normalize top-2 gate scores
    denom = gate_1 + gate_2 + eps
    gate_1 = gate_1 / denom
    gate_2 = gate_2 / denom

    # balancing loss (stored by the module, not returned by forward)
    density_1 = jnp.mean(mask_1, axis=-2)
    density_1_proxy = jnp.mean(density_1_proxy, axis=-2)
    loss = jnp.mean(density_1_proxy * density_1) * float(num_gates ** 2)

    if second_policy == "all":
        pass
    elif second_policy == "none":
        mask_2 = jnp.zeros_like(mask_2)
    elif second_policy == "threshold":
        mask_2 = mask_2 * (gate_2 > second_threshold).astype(mask_2.dtype)[..., None]
    elif second_policy == "random":
        # TODO(synk): torch uses an un-seeded uniform_ here; we use a fixed JAX
        # key for determinism.
        probs = jax.random.uniform(key, gate_2.shape, dtype=gate_2.dtype)
        keep = (probs < (gate_2 / max(second_threshold, eps))).astype(mask_2.dtype)
        mask_2 = mask_2 * keep[..., None]
    else:
        raise ValueError(second_policy)

    expert_capacity = min(group_size, int((group_size * capacity_factor) / num_gates))
    expert_capacity = max(expert_capacity, MIN_EXPERT_CAPACITY)
    expert_capacity_f = float(expert_capacity)
    cap_pad = -(-expert_capacity // capacity_pad_multiple) * capacity_pad_multiple

    position_in_expert_1 = _cumsum_exclusive(mask_1, axis=-2) * mask_1
    mask_1 = mask_1 * (position_in_expert_1 < expert_capacity_f).astype(mask_1.dtype)
    mask_1_count = jnp.sum(mask_1, axis=-2, keepdims=True)
    mask_1_flat = jnp.sum(mask_1, axis=-1)
    position_in_expert_1 = jnp.sum(position_in_expert_1, axis=-1)
    gate_1 = gate_1 * mask_1_flat

    position_in_expert_2 = _cumsum_exclusive(mask_2, axis=-2) + mask_1_count
    position_in_expert_2 = position_in_expert_2 * mask_2
    mask_2 = mask_2 * (position_in_expert_2 < expert_capacity_f).astype(mask_2.dtype)
    mask_2_flat = jnp.sum(mask_2, axis=-1)
    position_in_expert_2 = jnp.sum(position_in_expert_2, axis=-1)
    gate_2 = gate_2 * mask_2_flat

    # --- expert-major combine / dispatch construction (no [B,N,E,C] transpose) ---
    e_ids = jnp.arange(num_gates)
    eq1 = (index_1[None, :, :] == e_ids[:, None, None]).astype(x.dtype)  # [E,B,N]
    eq2 = (index_2[None, :, :] == e_ids[:, None, None]).astype(x.dtype)  # [E,B,N]
    pos1_oh = jax.nn.one_hot(position_in_expert_1.astype(jnp.int32), cap_pad,
                             dtype=x.dtype)                              # [B,N,Cp]
    pos2_oh = jax.nn.one_hot(position_in_expert_2.astype(jnp.int32), cap_pad,
                             dtype=x.dtype)                              # [B,N,Cp]
    g1 = gate_1 * mask_1_flat   # mask multiply is idempotent; mirrors torch expr
    g2 = gate_2 * mask_2_flat

    combine_e = (eq1[..., None] * (g1[..., None] * pos1_oh)[None]
                 + eq2[..., None] * (g2[..., None] * pos2_oh)[None])     # [E,B,N,Cp]
    dispatch_e = jnp.swapaxes((combine_e != 0).astype(x.dtype), 2, 3)    # [E,B,Cp,N]
    return dispatch_e, combine_e, loss, index_1, index_2


# ----------------------------------------------------------------------------
# Pallas kernel: per (token-tile, expert, H-chunk) dispatch -> ReLU MLP -> combine
# ----------------------------------------------------------------------------
def _moe_expert_kernel(x_ref, disp_ref, comb_ref, w1_ref, w2_ref, out_ref,
                       acc_ref, ei_ref, eo_ref):
    # grid = (token_tiles [parallel], experts [arbitrary], H_chunks [arbitrary])
    e = pl.program_id(1)
    hk = pl.program_id(2)
    n_e = pl.num_programs(1)
    n_h = pl.num_programs(2)

    B = x_ref.shape[0]
    Cp = disp_ref.shape[1]

    @pl.when((e == 0) & (hk == 0))
    def _init_acc():
        acc_ref[...] = jnp.zeros_like(acc_ref)

    @pl.when(hk == 0)
    def _dispatch():
        # expert_inputs[b, c, :] = x[b, n*, :] for the token n* routed to slot c.
        # Collapse (b, c) into rows of a (B*Cp, D) slab so the FFN below runs as
        # one wide MXU matmul instead of B tiny M=C ones (and no weight
        # broadcast_to is ever materialized).
        for b in range(B):  # static unroll; B is small
            ei_b = jnp.dot(disp_ref[b], x_ref[b],
                           preferred_element_type=jnp.float32)          # (Cp, D)
            ei_ref[b * Cp:(b + 1) * Cp, :] = ei_b.astype(ei_ref.dtype)
        eo_ref[...] = jnp.zeros_like(eo_ref)

    # Expert FFN on the flattened (B*Cp, D) slab, hidden dim streamed in
    # th-chunks:  eo += relu(ei @ w1[:, hs]) @ w2[hs, :]
    # (exact: ReLU is elementwise over the hidden axis and there is no bias).
    # TODO(synk): nn.Dropout(0.2) in Experts is treated as eval-mode identity.
    h = jnp.maximum(
        jnp.dot(ei_ref[...], w1_ref[...], preferred_element_type=jnp.float32),
        0.0)
    eo_ref[...] += jnp.dot(h.astype(jnp.bfloat16), w2_ref[...],
                           preferred_element_type=jnp.float32)

    @pl.when(hk == n_h - 1)
    def _combine():
        # out[b, n, :] += combine[b, n, c] * expert_out[b, c, :]
        for b in range(B):
            eo_b = eo_ref[b * Cp:(b + 1) * Cp, :].astype(jnp.bfloat16)   # (Cp, D)
            acc_ref[b, :, :] = acc_ref[b, :, :] + jnp.dot(
                comb_ref[b], eo_b, preferred_element_type=jnp.float32)

    @pl.when((e == n_e - 1) & (hk == n_h - 1))
    def _write():
        out_ref[...] = acc_ref[...].astype(out_ref.dtype)


def moe_forward_pallas(x, dispatch_e, combine_e, w1, w2, *,
                       token_tile=None, h_tile=None):
    """x [B,N,D] f32, dispatch_e [E,B,Cp,N], combine_e [E,B,N,Cp],
    w1 [E,D,H], w2 [E,H,D]  ->  output [B,N,D] f32."""
    B, N, D = x.shape
    E, _, H = w1.shape
    Cp = dispatch_e.shape[2]

    # Tile heuristics (fall back to full extents at small shapes).
    if token_tile is None:
        token_tile = 256 if (N > 256 and N % 256 == 0) else N
    if h_tile is None:
        h_tile = 512 if (H > 512 and H % 512 == 0) else H
    tn, th = token_tile, h_tile
    assert N % tn == 0 and H % th == 0
    T, NH = N // tn, H // th

    # bf16 operands, f32 accumulation inside the kernel.
    x_bf = x.astype(jnp.bfloat16)
    disp_bf = dispatch_e.astype(jnp.bfloat16)   # 0/1 mask: exact in bf16
    comb_bf = combine_e.astype(jnp.bfloat16)
    w1_bf = w1.astype(jnp.bfloat16)
    w2_bf = w2.astype(jnp.bfloat16)

    flops = int(4 * T * E * B * Cp * D * H + 4 * E * B * Cp * N * D)
    bytes_accessed = int(
        2 * (B * N * D) + 2 * (E * B * Cp * N) + 2 * (E * B * N * Cp)
        + 2 * T * (E * D * H + E * H * D) + 4 * (B * N * D))

    return pl.pallas_call(
        _moe_expert_kernel,
        out_shape=jax.ShapeDtypeStruct((B, N, D), jnp.float32),
        grid_spec=pltpu.PrefetchScalarGridSpec(
            num_scalar_prefetch=0,
            grid=(T, E, NH),
            in_specs=[
                pl.BlockSpec((B, tn, D), lambda t, e, h: (0, t, 0)),
                pl.BlockSpec((pl.Squeezed(), B, Cp, tn),
                             lambda t, e, h: (e, 0, 0, t)),
                pl.BlockSpec((pl.Squeezed(), B, tn, Cp),
                             lambda t, e, h: (e, 0, t, 0)),
                pl.BlockSpec((pl.Squeezed(), D, th),
                             lambda t, e, h: (e, 0, h)),
                pl.BlockSpec((pl.Squeezed(), th, D),
                             lambda t, e, h: (e, h, 0)),
            ],
            out_specs=pl.BlockSpec((B, tn, D), lambda t, e, h: (0, t, 0)),
            scratch_shapes=[
                pltpu.VMEM((B, tn, D), jnp.float32),      # output accumulator
                pltpu.VMEM((B * Cp, D), jnp.bfloat16),    # flattened expert inputs
                pltpu.VMEM((B * Cp, D), jnp.float32),     # expert-output accumulator
            ],
        ),
        compiler_params=pltpu.CompilerParams(
            dimension_semantics=("parallel", "arbitrary", "arbitrary"),
            vmem_limit_bytes=48 * 1024 * 1024,
        ),
        cost_estimate=pl.CostEstimate(flops=flops, transcendentals=0,
                                      bytes_accessed=bytes_accessed),
    )(x_bf, disp_bf, comb_bf, w1_bf, w2_bf)


# Pure-JAX f32 reference of the MoE hot path (for correctness check only).
def moe_forward_ref(x, dispatch_e, combine_e, w1, w2):
    ei = jnp.einsum("ebcn,bnd->ebcd", dispatch_e, x)
    h = jnp.maximum(jnp.einsum("ebcd,edh->ebch", ei, w1), 0.0)
    eo = jnp.einsum("ebch,ehd->ebcd", h, w2)
    return jnp.einsum("ebnc,ebcd->bnd", combine_e, eo)


if __name__ == "__main__":
    # Small shapes consistent with the module: inputs [b, n, d]
    B, N, D, E = 2, 8, 32, 4     # batch, tokens, dim, num_experts
    H = 64                       # hidden_dim of each expert MLP

    key = jax.random.PRNGKey(0)
    k_x, k_gate, k_w1, k_w2, k_policy = jax.random.split(key, 5)

    x = jax.random.normal(k_x, (B, N, D), dtype=jnp.float32)
    # Top2Gating: w_gating ~ randn(dim, num_gates)
    w_gating = jax.random.normal(k_gate, (D, E), dtype=jnp.float32)
    # Experts: w1/w2 ~ uniform(-1/sqrt(fan_out), 1/sqrt(fan_out))
    std1 = 1.0 / math.sqrt(H)
    std2 = 1.0 / math.sqrt(D)
    w1 = jax.random.uniform(k_w1, (E, D, H), minval=-std1, maxval=std1,
                            dtype=jnp.float32)
    w2 = jax.random.uniform(k_w2, (E, H, D), minval=-std2, maxval=std2,
                            dtype=jnp.float32)

    @jax.jit
    def moe_apply(x, w_gating, w1, w2, policy_key):
        disp_e, comb_e, loss, i1, i2 = top2_gating(
            x, w_gating, policy_key, num_gates=E,
            second_policy="random", second_threshold=0.2, capacity_factor=1.25)
        out = moe_forward_pallas(x, disp_e, comb_e, w1, w2)
        return out, loss

    out, loss = moe_apply(x, w_gating, w1, w2, k_policy)
    out = jax.block_until_ready(out)

    # f32 reference using the same gating decisions.
    disp_e, comb_e, _, _, _ = top2_gating(
        x, w_gating, k_policy, num_gates=E,
        second_policy="random", second_threshold=0.2, capacity_factor=1.25)
    ref = moe_forward_ref(x, disp_e, comb_e, w1, w2)

    assert out.shape == (B, N, D)
    # bf16 operands / f32 accumulation -> slightly loosened tolerance vs f32 ref.
    assert jnp.allclose(out, ref, atol=2e-2, rtol=2e-2), "mismatch vs JAX reference"

    print("KERNEL_OK")
</pallas_src>

<mosaic_0001>
module attributes {stable_mosaic.version = 11 : i64} {
  func.func @_moe_expert_kernel(%arg0: i32, %arg1: i32, %arg2: i32, %arg3: memref<2x8x32xbf16, #tpu.memory_space<vmem>>, %arg4: memref<1x2x8x8xbf16, #tpu.memory_space<vmem>>, %arg5: memref<1x2x8x8xbf16, #tpu.memory_space<vmem>>, %arg6: memref<1x32x64xbf16, #tpu.memory_space<vmem>>, %arg7: memref<1x64x32xbf16, #tpu.memory_space<vmem>>, %arg8: memref<2x8x32xf32, #tpu.memory_space<vmem>>, %arg9: memref<2x8x32xf32, #tpu.memory_space<vmem>>, %arg10: memref<16x32xbf16, #tpu.memory_space<vmem>>, %arg11: memref<16x32xf32, #tpu.memory_space<vmem>>) attributes {dimension_semantics = [#tpu.dimension_semantics<parallel>, #tpu.dimension_semantics<arbitrary>, #tpu.dimension_semantics<arbitrary>], iteration_bounds = array<i64: 1, 4, 1>, scalar_prefetch = 0 : i64, scratch_operands = 3 : i64, tpu.core_type = #tpu.core_type<tc>, window_params = [{transform_indices = @transform_0, window_bounds = array<i64: 2, 8, 32>}, {transform_indices = @transform_1, window_bounds = array<i64: 1, 2, 8, 8>}, {transform_indices = @transform_2, window_bounds = array<i64: 1, 2, 8, 8>}, {transform_indices = @transform_3, window_bounds = array<i64: 1, 32, 64>}, {transform_indices = @transform_4, window_bounds = array<i64: 1, 64, 32>}, {transform_indices = @transform_5, window_bounds = array<i64: 2, 8, 32>}]} {
    %c0_i32 = arith.constant 0 : i32
    %0 = arith.cmpi eq, %arg1, %c0_i32 : i32
    %c0_i32_0 = arith.constant 0 : i32
    %1 = arith.cmpi eq, %arg2, %c0_i32_0 : i32
    %2 = arith.andi %0, %1 : i1
    %3 = arith.extui %2 : i1 to i32
    %c0_i32_1 = arith.constant 0 : i32
    %4 = arith.cmpi ne, %3, %c0_i32_1 : i32
    scf.if %4 {
      %cst_21 = arith.constant 0.000000e+00 : f32
      %29 = vector.broadcast %cst_21 : f32 to vector<2x8x32xf32>
      %c0_22 = arith.constant 0 : index
      %c0_23 = arith.constant 0 : index
      %c0_24 = arith.constant 0 : index
      %30 = vector.load %arg9[%c0_22, %c0_23, %c0_24] : memref<2x8x32xf32, #tpu.memory_space<vmem>>, vector<2x8x32xf32>
      tpu.vector_store %arg9[%c0_22, %c0_23, %c0_24], %29 {strides = array<i32>} : memref<2x8x32xf32, #tpu.memory_space<vmem>>, vector<2x8x32xf32>,
    } else {
    }
    %c0_i32_2 = arith.constant 0 : i32
    %5 = arith.cmpi eq, %arg2, %c0_i32_2 : i32
    %6 = arith.extui %5 : i1 to i32
    %c0_i32_3 = arith.constant 0 : i32
    %7 = arith.cmpi ne, %6, %c0_i32_3 : i32
    scf.if %7 {
      %c0_21 = arith.constant 0 : index
      %c0_22 = arith.constant 0 : index
      %c0_23 = arith.constant 0 : index
      %c0_24 = arith.constant 0 : index
      %29 = vector.load %arg4[%c0_21, %c0_22, %c0_23, %c0_24] : memref<1x2x8x8xbf16, #tpu.memory_space<vmem>>, vector<1x1x8x8xbf16>
      %30 = vector.shape_cast %29 : vector<1x1x8x8xbf16> to vector<8x8xbf16>
      %c0_25 = arith.constant 0 : index
      %c0_26 = arith.constant 0 : index
      %c0_27 = arith.constant 0 : index
      %31 = vector.load %arg3[%c0_25, %c0_26, %c0_27] : memref<2x8x32xbf16, #tpu.memory_space<vmem>>, vector<1x8x32xbf16>
      %32 = vector.shape_cast %31 : vector<1x8x32xbf16> to vector<8x32xbf16>
      %cst_28 = arith.constant dense<0.000000e+00> : vector<8x32xf32>
      %33 = tpu.matmul %30, %32, %cst_28 {dimension_numbers = #tpu.dot_dimension_numbers<[1], [0], [0], [1], [0, 0, 1, 1], [], []>} : vector<8x8xbf16>, vector<8x32xbf16>, vector<8x32xf32> -> vector<8x32xf32>
      %34 = arith.truncf %33 : vector<8x32xf32> to vector<8x32xbf16>
      %c0_29 = arith.constant 0 : index
      %c0_30 = arith.constant 0 : index
      %35 = vector.load %arg10[%c0_29, %c0_30] : memref<16x32xbf16, #tpu.memory_space<vmem>>, vector<8x32xbf16>
      tpu.vector_store %arg10[%c0_29, %c0_30], %34 {strides = array<i32>} : memref<16x32xbf16, #tpu.memory_space<vmem>>, vector<8x32xbf16>,
      %c0_31 = arith.constant 0 : index
      %c1 = arith.constant 1 : index
      %c0_32 = arith.constant 0 : index
      %c0_33 = arith.constant 0 : index
      %36 = vector.load %arg4[%c0_31, %c1, %c0_32, %c0_33] : memref<1x2x8x8xbf16, #tpu.memory_space<vmem>>, vector<1x1x8x8xbf16>
      %37 = vector.shape_cast %36 : vector<1x1x8x8xbf16> to vector<8x8xbf16>
      %c1_34 = arith.constant 1 : index
      %c0_35 = arith.constant 0 : index
      %c0_36 = arith.constant 0 : index
      %38 = vector.load %arg3[%c1_34, %c0_35, %c0_36] : memref<2x8x32xbf16, #tpu.memory_space<vmem>>, vector<1x8x32xbf16>
      %39 = vector.shape_cast %38 : vector<1x8x32xbf16> to vector<8x32xbf16>
      %cst_37 = arith.constant dense<0.000000e+00> : vector<8x32xf32>
      %40 = tpu.matmul %37, %39, %cst_37 {dimension_numbers = #tpu.dot_dimension_numbers<[1], [0], [0], [1], [0, 0, 1, 1], [], []>} : vector<8x8xbf16>, vector<8x32xbf16>, vector<8x32xf32> -> vector<8x32xf32>
      %41 = arith.truncf %40 : vector<8x32xf32> to vector<8x32xbf16>
      %c8 = arith.constant 8 : index
      %c0_38 = arith.constant 0 : index
      %42 = vector.load %arg10[%c8, %c0_38] : memref<16x32xbf16, #tpu.memory_space<vmem>>, vector<8x32xbf16>
      tpu.vector_store %arg10[%c8, %c0_38], %41 {strides = array<i32>} : memref<16x32xbf16, #tpu.memory_space<vmem>>, vector<8x32xbf16>,
      %cst_39 = arith.constant 0.000000e+00 : f32
      %43 = vector.broadcast %cst_39 : f32 to vector<16x32xf32>
      %c0_40 = arith.constant 0 : index
      %c0_41 = arith.constant 0 : index
      %44 = vector.load %arg11[%c0_40, %c0_41] : memref<16x32xf32, #tpu.memory_space<vmem>>, vector<16x32xf32>
      tpu.vector_store %arg11[%c0_40, %c0_41], %43 {strides = array<i32>} : memref<16x32xf32, #tpu.memory_space<vmem>>, vector<16x32xf32>,
    } else {
    }
    %c0 = arith.constant 0 : index
    %c0_4 = arith.constant 0 : index
    %8 = vector.load %arg10[%c0, %c0_4] : memref<16x32xbf16, #tpu.memory_space<vmem>>, vector<16x32xbf16>
    %c0_5 = arith.constant 0 : index
    %c0_6 = arith.constant 0 : index
    %c0_7 = arith.constant 0 : index
    %9 = vector.load %arg6[%c0_5, %c0_6, %c0_7] : memref<1x32x64xbf16, #tpu.memory_space<vmem>>, vector<1x32x64xbf16>
    %10 = vector.shape_cast %9 : vector<1x32x64xbf16> to vector<32x64xbf16>
    %cst = arith.constant dense<0.000000e+00> : vector<16x64xf32>
    %11 = tpu.matmul %8, %10, %cst {dimension_numbers = #tpu.dot_dimension_numbers<[1], [0], [0], [1], [0, 0, 1, 1], [], []>} : vector<16x32xbf16>, vector<32x64xbf16>, vector<16x64xf32> -> vector<16x64xf32>
    %cst_8 = arith.constant 0.000000e+00 : f32
    %12 = vector.broadcast %cst_8 : f32 to vector<16x64xf32>
    %13 = arith.maximumf %11, %12 : vector<16x64xf32>
    %c0_9 = arith.constant 0 : index
    %c0_10 = arith.constant 0 : index
    %14 = vector.load %arg11[%c0_9, %c0_10] : memref<16x32xf32, #tpu.memory_space<vmem>>, vector<16x32xf32>
    %15 = arith.truncf %13 : vector<16x64xf32> to vector<16x64xbf16>
    %c0_11 = arith.constant 0 : index
    %c0_12 = arith.constant 0 : index
    %c0_13 = arith.constant 0 : index
    %16 = vector.load %arg7[%c0_11, %c0_12, %c0_13] : memref<1x64x32xbf16, #tpu.memory_space<vmem>>, vector<1x64x32xbf16>
    %17 = vector.shape_cast %16 : vector<1x64x32xbf16> to vector<64x32xbf16>
    %cst_14 = arith.constant dense<0.000000e+00> : vector<16x32xf32>
    %18 = tpu.matmul %15, %17, %cst_14 {dimension_numbers = #tpu.dot_dimension_numbers<[1], [0], [0], [1], [0, 0, 1, 1], [], []>} : vector<16x64xbf16>, vector<64x32xbf16>, vector<16x32xf32> -> vector<16x32xf32>
    %19 = arith.addf %14, %18 : vector<16x32xf32>
    %c0_15 = arith.constant 0 : index
    %c0_16 = arith.constant 0 : index
    %20 = vector.load %arg11[%c0_15, %c0_16] : memref<16x32xf32, #tpu.memory_space<vmem>>, vector<16x32xf32>
    tpu.vector_store %arg11[%c0_15, %c0_16], %19 {strides = array<i32>} : memref<16x32xf32, #tpu.memory_space<vmem>>, vector<16x32xf32>,
    %c0_i32_17 = arith.constant 0 : i32
    %21 = arith.cmpi eq, %arg2, %c0_i32_17 : i32
    %22 = arith.extui %21 : i1 to i32
    %c0_i32_18 = arith.constant 0 : i32
    %23 = arith.cmpi ne, %22, %c0_i32_18 : i32
    scf.if %23 {
      %c0_21 = arith.constant 0 : index
      %c0_22 = arith.constant 0 : index
      %29 = vector.load %arg11[%c0_21, %c0_22] : memref<16x32xf32, #tpu.memory_space<vmem>>, vector<8x32xf32>
      %30 = arith.truncf %29 : vector<8x32xf32> to vector<8x32xbf16>
      %c0_23 = arith.constant 0 : index
      %c0_24 = arith.constant 0 : index
      %c0_25 = arith.constant 0 : index
      %31 = vector.load %arg9[%c0_23, %c0_24, %c0_25] : memref<2x8x32xf32, #tpu.memory_space<vmem>>, vector<1x8x32xf32>
      %32 = vector.shape_cast %31 : vector<1x8x32xf32> to vector<8x32xf32>
      %c0_26 = arith.constant 0 : index
      %c0_27 = arith.constant 0 : index
      %c0_28 = arith.constant 0 : index
      %c0_29 = arith.constant 0 : index
      %33 = vector.load %arg5[%c0_26, %c0_27, %c0_28, %c0_29] : memref<1x2x8x8xbf16, #tpu.memory_space<vmem>>, vector<1x1x8x8xbf16>
      %34 = vector.shape_cast %33 : vector<1x1x8x8xbf16> to vector<8x8xbf16>
      %cst_30 = arith.constant dense<0.000000e+00> : vector<8x32xf32>
      %35 = tpu.matmul %34, %30, %cst_30 {dimension_numbers = #tpu.dot_dimension_numbers<[1], [0], [0], [1], [0, 0, 1, 1], [], []>} : vector<8x8xbf16>, vector<8x32xbf16>, vector<8x32xf32> -> vector<8x32xf32>
      %36 = arith.addf %32, %35 : vector<8x32xf32>
      %c0_31 = arith.constant 0 : index
      %c0_32 = arith.constant 0 : index
      %c0_33 = arith.constant 0 : index
      %37 = vector.load %arg9[%c0_31, %c0_32, %c0_33] : memref<2x8x32xf32, #tpu.memory_space<vmem>>, vector<1x8x32xf32>
      %38 = vector.shape_cast %37 : vector<1x8x32xf32> to vector<8x32xf32>
      %39 = vector.shape_cast %36 : vector<8x32xf32> to vector<1x8x32xf32>
      tpu.vector_store %arg9[%c0_31, %c0_32, %c0_33], %39 {strides = array<i32>} : memref<2x8x32xf32, #tpu.memory_space<vmem>>, vector<1x8x32xf32>,
      %c8 = arith.constant 8 : index
      %c0_34 = arith.constant 0 : index
      %40 = vector.load %arg11[%c8, %c0_34] : memref<16x32xf32, #tpu.memory_space<vmem>>, vector<8x32xf32>
      %41 = arith.truncf %40 : vector<8x32xf32> to vector<8x32xbf16>
      %c1 = arith.constant 1 : index
      %c0_35 = arith.constant 0 : index
      %c0_36 = arith.constant 0 : index
      %42 = vector.load %arg9[%c1, %c0_35, %c0_36] : memref<2x8x32xf32, #tpu.memory_space<vmem>>, vector<1x8x32xf32>
      %43 = vector.shape_cast %42 : vector<1x8x32xf32> to vector<8x32xf32>
      %c0_37 = arith.constant 0 : index
      %c1_38 = arith.constant 1 : index
      %c0_39 = arith.constant 0 : index
      %c0_40 = arith.constant 0 : index
      %44 = vector.load %arg5[%c0_37, %c1_38, %c0_39, %c0_40] : memref<1x2x8x8xbf16, #tpu.memory_space<vmem>>, vector<1x1x8x8xbf16>
      %45 = vector.shape_cast %44 : vector<1x1x8x8xbf16> to vector<8x8xbf16>
      %cst_41 = arith.constant dense<0.000000e+00> : vector<8x32xf32>
      %46 = tpu.matmul %45, %41, %cst_41 {dimension_numbers = #tpu.dot_dimension_numbers<[1], [0], [0], [1], [0, 0, 1, 1], [], []>} : vector<8x8xbf16>, vector<8x32xbf16>, vector<8x32xf32> -> vector<8x32xf32>
      %47 = arith.addf %43, %46 : vector<8x32xf32>
      %c1_42 = arith.constant 1 : index
      %c0_43 = arith.constant 0 : index
      %c0_44 = arith.constant 0 : index
      %48 = vector.load %arg9[%c1_42, %c0_43, %c0_44] : memref<2x8x32xf32, #tpu.memory_space<vmem>>, vector<1x8x32xf32>
      %49 = vector.shape_cast %48 : vector<1x8x32xf32> to vector<8x32xf32>
      %50 = vector.shape_cast %47 : vector<8x32xf32> to vector<1x8x32xf32>
      tpu.vector_store %arg9[%c1_42, %c0_43, %c0_44], %50 {strides = array<i32>} : memref<2x8x32xf32, #tpu.memory_space<vmem>>, vector<1x8x32xf32>,
    } else {
    }
    %c3_i32 = arith.constant 3 : i32
    %24 = arith.cmpi eq, %arg1, %c3_i32 : i32
    %c0_i32_19 = arith.constant 0 : i32
    %25 = arith.cmpi eq, %arg2, %c0_i32_19 : i32
    %26 = arith.andi %24, %25 : i1
    %27 = arith.extui %26 : i1 to i32
    %c0_i32_20 = arith.constant 0 : i32
    %28 = arith.cmpi ne, %27, %c0_i32_20 : i32
    scf.if %28 {
      %c0_21 = arith.constant 0 : index
      %c0_22 = arith.constant 0 : index
      %c0_23 = arith.constant 0 : index
      %29 = vector.load %arg9[%c0_21, %c0_22, %c0_23] : memref<2x8x32xf32, #tpu.memory_space<vmem>>, vector<2x8x32xf32>
      %c0_24 = arith.constant 0 : index
      %c0_25 = arith.constant 0 : index
      %c0_26 = arith.constant 0 : index
      %30 = vector.load %arg8[%c0_24, %c0_25, %c0_26] : memref<2x8x32xf32, #tpu.memory_space<vmem>>, vector<2x8x32xf32>
      tpu.vector_store %arg8[%c0_24, %c0_25, %c0_26], %29 {strides = array<i32>} : memref<2x8x32xf32, #tpu.memory_space<vmem>>, vector<2x8x32xf32>,
    } else {
    }
    return
  }
  func.func @transform_0(%arg0: i32, %arg1: i32, %arg2: i32) -> (i32, i32, i32) {
    %c0_i32 = arith.constant 0 : i32
    %c0_i32_0 = arith.constant 0 : i32
    %c0_i32_1 = arith.constant 0 : i32
    return %c0_i32, %arg0, %c0_i32_0 : i32, i32, i32
  }
  func.func @transform_1(%arg0: i32, %arg1: i32, %arg2: i32) -> (i32, i32, i32, i32) {
    %c0_i32 = arith.constant 0 : i32
    %c0_i32_0 = arith.constant 0 : i32
    %c0_i32_1 = arith.constant 0 : i32
    return %arg1, %c0_i32, %c0_i32_0, %arg0 : i32, i32, i32, i32
  }
  func.func @transform_2(%arg0: i32, %arg1: i32, %arg2: i32) -> (i32, i32, i32, i32) {
    %c0_i32 = arith.constant 0 : i32
    %c0_i32_0 = arith.constant 0 : i32
    %c0_i32_1 = arith.constant 0 : i32
    return %arg1, %c0_i32, %arg0, %c0_i32_0 : i32, i32, i32, i32
  }
  func.func @transform_3(%arg0: i32, %arg1: i32, %arg2: i32) -> (i32, i32, i32) {
    %c0_i32 = arith.constant 0 : i32
    %c0_i32_0 = arith.constant 0 : i32
    return %arg1, %c0_i32, %arg2 : i32, i32, i32
  }
  func.func @transform_4(%arg0: i32, %arg1: i32, %arg2: i32) -> (i32, i32, i32) {
    %c0_i32 = arith.constant 0 : i32
    %c0_i32_0 = arith.constant 0 : i32
    return %arg1, %arg2, %c0_i32 : i32, i32, i32
  }
  func.func @transform_5(%arg0: i32, %arg1: i32, %arg2: i32) -> (i32, i32, i32) {
    %c0_i32 = arith.constant 0 : i32
    %c0_i32_0 = arith.constant 0 : i32
    %c0_i32_1 = arith.constant 0 : i32
    return %c0_i32, %arg0, %c0_i32_0 : i32, i32, i32
  }
}

</mosaic_0001>

<llo_original>
// kernel: moe_apply.1
$region0: #{moe_apply.1}
  #allocation0 [shape = 'u32[]', space=smem, size = 0x4, offset = 0x4, fixed_abs, tag = 'smem constant byte address 0x4 - core index']
  #allocation1 [shape = 'u32[72,128]{1,0:T(1,128)}', space=vmem, size = 0x9000, scoped, tag = 'internal scratch']
  #allocation2 [shape = 'f32[2,8,32]{2,1,0:T(8,128)}', space=vmem, size = 0x2000, scoped, tag = 'scratch operand']
  #allocation3 [shape = 'bf16[16,32]{1,0:T(8,128)(2,1)}', space=vmem, size = 0x1000, scoped, tag = 'scratch operand']
  #allocation4 [shape = 'f32[16,32]{1,0:T(8,128)}', space=vmem, size = 0x2000, scoped, tag = 'scratch operand']
  %s0 = inlined_call_operand.vmem [shape: bf16[2,8,32], index: 0, kind: input, shape index: {}]
  %s1 = inlined_call_operand.vmem [shape: bf16[4,2,8,8], index: 1, kind: input, shape index: {}]
  %s2 = inlined_call_operand.vmem [shape: bf16[4,2,8,8], index: 2, kind: input, shape index: {}]
  %s3 = inlined_call_operand.vmem [shape: bf16[4,32,64], index: 3, kind: input, shape index: {}]
  %s4 = inlined_call_operand.vmem [shape: bf16[4,64,32], index: 4, kind: input, shape index: {}]
  %s5 = inlined_call_operand.hbm [shape: f32[2,8,32], index: 5, kind: output, shape index: {}]
  %s6 = sld [smem:[#allocation0]]
  $region69: #{moe_apply.1} parent=0
    _
  %s8 = ssub.s32 1, %s6
  %s9 = scalar_select 0, %s8, %s6
  $region1: #{moe_apply.1} parent=0
    #allocation5 [shape = 'u8[8192]{0}', space=vmem, size = 0x2000, scoped, tag = 'output window, operand 0, single buffered']
    #allocation6 [shape = 's32[2]{0}', space=sflag, size = 0x8, scoped, tag = 'scoped memory for moe_apply.1']
    %10 = vsyncpa [#allocation6], 0
    loop: start=0, step=1, limit=6
    $region2: #{moe_apply.1} parent=1 // loop_pre_header
      _
    $region3: #{moe_apply.1} parent=1 // loop_header
      %s12 = sphi 0, %s16
      %p13 = scmp.ge.s32.totalorder %s12, 6
      %s19 = sphi 0, %s38
      %s20 = sphi 0, %s34
      %s21 = sphi 0, %s30
      %s22 = sphi 0, %s19
      %s23 = sphi 0, %s20
      %s24 = sphi 0, %s21
      %s25 = sphi 0, %s22
      %s26 = sphi 0, %s23
      %s27 = sphi 0, %s24
      %s41 = sphi 0, %s43
      %s44 = sphi 0, %s41
      %s45 = sphi 0, %s44
      %s61 = sphi 0, %s45
      %s69 = sphi 0, %s71
      %s72 = sphi 0, %s69
      %s73 = sphi 0, %s72
      %s89 = sphi 0, %s73
      %s97 = sphi 0, %s99
      %s100 = sphi 0, %s97
      %s101 = sphi 0, %s100
      %s117 = sphi 0, %s101
      %s125 = sphi 0, %s127
      %s128 = sphi 0, %s125
      %s129 = sphi 0, %s128
      %s145 = sphi 0, %s129
      %s153 = sphi 0, %s155
      %s156 = sphi 0, %s153
      %s157 = sphi 0, %s156
      %s173 = sphi 0, %s157
      %s179 = sphi 0, %s181
      %s182 = sphi 0, %s179
      %s183 = sphi 0, %s182
      %s199 = sphi 0, %s183
    $region4: #{moe_apply.1} parent=1 // loop_header_branch
      %15 = sbr.rel (%p13) target = $region8
    $region5: #{moe_apply.1} parent=1 // loop_body
      %s17 = ssub.s32 %s12, 1
      %s18 = ssub.s32 %s12, 2
      %s28 = sadd.s32 1, %s21
      %p29 = scmp.ge.s32.totalorder %s28, 1
      %s30 = scalar_select %p29, 0, %s28
      %s31 = sadd.s32 1, %s20
      %s32 = scalar_select %p29, %s31, %s20
      %p33 = scmp.ge.s32.totalorder %s32, 4
      %s34 = scalar_select %p33, 0, %s32
      %s35 = sadd.s32 1, %s19
      %s36 = scalar_select %p33, %s35, %s19
      %p37 = scmp.ge.s32.totalorder %s36, 1
      %s38 = scalar_select %p37, 0, %s36
      %s39 = ssub.s32 %s19, %s38
      %p40 = scmp.eq.s32.totalorder %s39, 0
      %s42 = sadd.s32 %s41, 1
      %s43 = scalar_select %p40, %s41, %s42
      %p46 = pneg %p40
      %p47 = scmp.eq.s32.totalorder %s12, 3
      %p48 = por %p46, %p47
      %p49 = scmp.ne.s32.totalorder %s41, %s44
      %p50 = scmp.eq.s32.totalorder %s12, 0
      %p51 = por %p49, %p50
      %p52 = scmp.ne.s32.totalorder %s41, %s44
      %p53 = scmp.eq.s32.totalorder %s17, 3
      %p54 = por %p52, %p53
      %p55 = scmp.ne.s32.totalorder %s44, %s45
      %p56 = scmp.eq.s32.totalorder %s17, 0
      %p57 = por %p55, %p56
      %p58 = scmp.ne.s32.totalorder %s44, %s45
      %p59 = scmp.eq.s32.totalorder %s18, 3
      %p60 = por %p58, %p59
      %p62 = scmp.ne.s32.totalorder %s45, %s61
      %p63 = scmp.eq.s32.totalorder %s18, 0
      %p64 = por %p62, %p63
      %s65 = ssub.s32 %s20, %s34
      %s66 = ssub.s32 %s19, %s38
      %s67 = sor.u32 %s65, %s66
      %p68 = scmp.eq.s32.totalorder %s67, 0
      %s70 = sadd.s32 %s69, 1
      %s71 = scalar_select %p68, %s69, %s70
      %p74 = pneg %p68
      %p75 = scmp.eq.s32.totalorder %s12, 3
      %p76 = por %p74, %p75
      %p77 = scmp.ne.s32.totalorder %s69, %s72
      %p78 = scmp.eq.s32.totalorder %s12, 0
      %p79 = por %p77, %p78
      %p80 = scmp.ne.s32.totalorder %s69, %s72
      %p81 = scmp.eq.s32.totalorder %s17, 3
      %p82 = por %p80, %p81
      %p83 = scmp.ne.s32.totalorder %s72, %s73
      %p84 = scmp.eq.s32.totalorder %s17, 0
      %p85 = por %p83, %p84
      %p86 = scmp.ne.s32.totalorder %s72, %s73
      %p87 = scmp.eq.s32.totalorder %s18, 3
      %p88 = por %p86, %p87
      %p90 = scmp.ne.s32.totalorder %s73, %s89
      %p91 = scmp.eq.s32.totalorder %s18, 0
      %p92 = por %p90, %p91
      %s93 = ssub.s32 %s20, %s34
      %s94 = ssub.s32 %s19, %s38
      %s95 = sor.u32 %s93, %s94
      %p96 = scmp.eq.s32.totalorder %s95, 0
      %s98 = sadd.s32 %s97, 1
      %s99 = scalar_select %p96, %s97, %s98
      %p102 = pneg %p96
      %p103 = scmp.eq.s32.totalorder %s12, 3
      %p104 = por %p102, %p103
      %p105 = scmp.ne.s32.totalorder %s97, %s100
      %p106 = scmp.eq.s32.totalorder %s12, 0
      %p107 = por %p105, %p106
      %p108 = scmp.ne.s32.totalorder %s97, %s100
      %p109 = scmp.eq.s32.totalorder %s17, 3
      %p110 = por %p108, %p109
      %p111 = scmp.ne.s32.totalorder %s100, %s101
      %p112 = scmp.eq.s32.totalorder %s17, 0
      %p113 = por %p111, %p112
      %p114 = scmp.ne.s32.totalorder %s100, %s101
      %p115 = scmp.eq.s32.totalorder %s18, 3
      %p116 = por %p114, %p115
      %p118 = scmp.ne.s32.totalorder %s101, %s117
      %p119 = scmp.eq.s32.totalorder %s18, 0
      %p120 = por %p118, %p119
      %s121 = ssub.s32 %s20, %s34
      %s122 = ssub.s32 %s21, %s30
      %s123 = sor.u32 %s121, %s122
      %p124 = scmp.eq.s32.totalorder %s123, 0
      %s126 = sadd.s32 %s125, 1
      %s127 = scalar_select %p124, %s125, %s126
      %p130 = pneg %p124
      %p131 = scmp.eq.s32.totalorder %s12, 3
      %p132 = por %p130, %p131
      %p133 = scmp.ne.s32.totalorder %s125, %s128
      %p134 = scmp.eq.s32.totalorder %s12, 0
      %p135 = por %p133, %p134
      %p136 = scmp.ne.s32.totalorder %s125, %s128
      %p137 = scmp.eq.s32.totalorder %s17, 3
      %p138 = por %p136, %p137
      %p139 = scmp.ne.s32.totalorder %s128, %s129
      %p140 = scmp.eq.s32.totalorder %s17, 0
      %p141 = por %p139, %p140
      %p142 = scmp.ne.s32.totalorder %s128, %s129
      %p143 = scmp.eq.s32.totalorder %s18, 3
      %p144 = por %p142, %p143
      %p146 = scmp.ne.s32.totalorder %s129, %s145
      %p147 = scmp.eq.s32.totalorder %s18, 0
      %p148 = por %p146, %p147
      %s149 = ssub.s32 %s20, %s34
      %s150 = ssub.s32 %s21, %s30
      %s151 = sor.u32 %s149, %s150
      %p152 = scmp.eq.s32.totalorder %s151, 0
      %s154 = sadd.s32 %s153, 1
      %s155 = scalar_select %p152, %s153, %s154
      %p158 = pneg %p152
      %p159 = scmp.eq.s32.totalorder %s12, 3
      %p160 = por %p158, %p159
      %p161 = scmp.ne.s32.totalorder %s153, %s156
      %p162 = scmp.eq.s32.totalorder %s12, 0
      %p163 = por %p161, %p162
      %p164 = scmp.ne.s32.totalorder %s153, %s156
      %p165 = scmp.eq.s32.totalorder %s17, 3
      %p166 = por %p164, %p165
      %p167 = scmp.ne.s32.totalorder %s156, %s157
      %p168 = scmp.eq.s32.totalorder %s17, 0
      %p169 = por %p167, %p168
      %p170 = scmp.ne.s32.totalorder %s156, %s157
      %p171 = scmp.eq.s32.totalorder %s18, 3
      %p172 = por %p170, %p171
      %p174 = scmp.ne.s32.totalorder %s157, %s173
      %p175 = scmp.eq.s32.totalorder %s18, 0
      %p176 = por %p174, %p175
      %s177 = ssub.s32 %s19, %s38
      %p178 = scmp.eq.s32.totalorder %s177, 0
      %s180 = sadd.s32 %s179, 1
      %s181 = scalar_select %p178, %s179, %s180
      %p184 = pneg %p178
      %p185 = scmp.eq.s32.totalorder %s12, 3
      %p186 = por %p184, %p185
      %p187 = scmp.ne.s32.totalorder %s179, %s182
      %p188 = scmp.eq.s32.totalorder %s12, 0
      %p189 = por %p187, %p188
      %p190 = scmp.ne.s32.totalorder %s179, %s182
      %p191 = scmp.eq.s32.totalorder %s17, 3
      %p192 = por %p190, %p191
      %p193 = scmp.ne.s32.totalorder %s182, %s183
      %p194 = scmp.eq.s32.totalorder %s17, 0
      %p195 = por %p193, %p194
      %p196 = scmp.ne.s32.totalorder %s182, %s183
      %p197 = scmp.eq.s32.totalorder %s18, 3
      %p198 = por %p196, %p197
      %p200 = scmp.ne.s32.totalorder %s183, %s199
      %p201 = scmp.eq.s32.totalorder %s18, 0
      %p202 = por %p200, %p201
      %p203 = scmp.le.s32.totalorder 1, %s12
      %p204 = scmp.lt.s32.totalorder %s12, 5
      %p205 = pnand %p203, %p204
      %p206 = pneg %p205
      // Predicated region
      $region9: #{moe_apply.1} parent=5 // pred_check
        _
      $region10: #{moe_apply.1} parent=5 // pred_check_branch
        %208 = sbr.rel (%p205) target = $region12
      $region11: #{moe_apply.1} parent=5 // pred_region
        %s209 = ssub.s32 %s12, 1
        // Predicated region
        $region13: #{moe_apply.1} parent=11 // pred_check
          %p210 = pneg %p57
        $region14: #{moe_apply.1} parent=11 // pred_check_branch
          %212 = sbr.rel (%p210) target = $region16
        $region15: #{moe_apply.1} parent=11 // pred_region
          %p213 = scmp.lt.s32.totalorder %s22, 0
          %s214 = scalar_select %p213, %s22, 0
          %s215 = smul.addr %s214, 4
          %s216 = scalar_lea.vmem %s0, %s215
        $region16: #{moe_apply.1} parent=11 // pred_fallthru
          _
      $region12: #{moe_apply.1} parent=5 // pred_fallthru
        _
      %p217 = scmp.lt.s32.totalorder %s12, 4
      // Predicated region
      $region17: #{moe_apply.1} parent=5 // pred_check
        %p218 = pneg %p217
      $region18: #{moe_apply.1} parent=5 // pred_check_branch
        %220 = sbr.rel (%p218) target = $region20
      $region19: #{moe_apply.1} parent=5 // pred_region
        // Predicated region
        $region21: #{moe_apply.1} parent=19 // pred_check
          %p221 = pneg %p79
        $region22: #{moe_apply.1} parent=19 // pred_check_branch
          %223 = sbr.rel (%p221) target = $region24
        $region23: #{moe_apply.1} parent=19 // pred_region
          %p224 = scmp.lt.s32.totalorder %s20, 3
          %s225 = scalar_select %p224, %s20, 3
          %p226 = scmp.lt.s32.totalorder %s19, 0
          %s227 = scalar_select %p226, %s19, 0
          %s228 = smul.addr %s225, 2
          %s229 = sadd.s32 %s227, %s228
          %s230 = smul.addr %s229, 4
          %s231 = scalar_lea.vmem %s1, %s230
        $region24: #{moe_apply.1} parent=19 // pred_fallthru
          _
        // Predicated region
        $region25: #{moe_apply.1} parent=19 // pred_check
          %p232 = pneg %p107
        $region26: #{moe_apply.1} parent=19 // pred_check_branch
          %234 = sbr.rel (%p232) target = $region28
        $region27: #{moe_apply.1} parent=19 // pred_region
          %p235 = scmp.lt.s32.totalorder %s20, 3
          %s236 = scalar_select %p235, %s20, 3
          %p237 = scmp.lt.s32.totalorder %s19, 0
          %s238 = scalar_select %p237, %s19, 0
          %s239 = smul.addr %s236, 2
          %s240 = sadd.s32 %s238, %s239
          %s241 = smul.addr %s240, 4
          %s242 = scalar_lea.vmem %s2, %s241
        $region28: #{moe_apply.1} parent=19 // pred_fallthru
          _
        // Predicated region
        $region29: #{moe_apply.1} parent=19 // pred_check
          %p243 = pneg %p135
        $region30: #{moe_apply.1} parent=19 // pred_check_branch
          %245 = sbr.rel (%p243) target = $region32
        $region31: #{moe_apply.1} parent=19 // pred_region
          %p246 = scmp.lt.s32.totalorder %s20, 3
          %s247 = scalar_select %p246, %s20, 3
          %p248 = scmp.lt.s32.totalorder %s21, 0
          %s249 = scalar_select %p248, %s21, 0
          %s250 = smul.addr %s247, 4
          %s251 = sadd.s32 %s249, %s250
          %s252 = smul.addr %s251, 4
          %s253 = scalar_lea.vmem %s3, %s252
        $region32: #{moe_apply.1} parent=19 // pred_fallthru
          _
        // Predicated region
        $region33: #{moe_apply.1} parent=19 // pred_check
          %p254 = pneg %p163
        $region34: #{moe_apply.1} parent=19 // pred_check_branch
          %256 = sbr.rel (%p254) target = $region36
        $region35: #{moe_apply.1} parent=19 // pred_region
          %s257 = smul.u32 8, %s21
          %p258 = scmp.lt.s32.totalorder %s20, 3
          %s259 = scalar_select %p258, %s20, 3
          %p260 = scmp.lt.s32.totalorder %s257, 7
          %s261 = scalar_select %p260, %s257, 7
          %s262 = smul.addr %s259, 8
          %s263 = sadd.s32 %s261, %s262
          %s264 = smul.addr %s263, 4
          %s265 = scalar_lea.vmem %s4, %s264
          %s266 = smul.u32 8, %s21
        $region36: #{moe_apply.1} parent=19 // pred_fallthru
          _
      $region20: #{moe_apply.1} parent=5 // pred_fallthru
        _
      %p267 = scmp.le.s32.totalorder 1, %s12
      %p268 = scmp.lt.s32.totalorder %s12, 5
      %p269 = pnand %p267, %p268
      %p270 = pneg %p269
      // Predicated region
      $region37: #{moe_apply.1} parent=5 // pred_check
        _
      $region38: #{moe_apply.1} parent=5 // pred_check_branch
        %272 = sbr.rel (%p269) target = $region40
      $region39: #{moe_apply.1} parent=5 // pred_region
        %s273 = ssub.s32 %s12, 1
        %p274 = scmp.lt.s32.totalorder %s22, 0
        %s275 = scalar_select %p274, %s22, 0
        %s276 = smul.addr %s275, 4
        %s277 = scalar_lea.vmem %s0, %s276
        %p278 = pneg %p57
        %p279 = pneg %p54
        %p280 = scmp.lt.s32.totalorder %s23, 3
        %s281 = scalar_select %p280, %s23, 3
        %p282 = scmp.lt.s32.totalorder %s22, 0
        %s283 = scalar_select %p282, %s22, 0
        %s284 = smul.addr %s281, 2
        %s285 = sadd.s32 %s283, %s284
        %s286 = smul.addr %s285, 4
        %s287 = scalar_lea.vmem %s1, %s286
        %p288 = pneg %p85
        %p289 = pneg %p82
        %p290 = scmp.lt.s32.totalorder %s23, 3
        %s291 = scalar_select %p290, %s23, 3
        %p292 = scmp.lt.s32.totalorder %s22, 0
        %s293 = scalar_select %p292, %s22, 0
        %s294 = smul.addr %s291, 2
        %s295 = sadd.s32 %s293, %s294
        %s296 = smul.addr %s295, 4
        %s297 = scalar_lea.vmem %s2, %s296
        %p298 = pneg %p113
        %p299 = pneg %p110
        %p300 = scmp.lt.s32.totalorder %s23, 3
        %s301 = scalar_select %p300, %s23, 3
        %p302 = scmp.lt.s32.totalorder %s24, 0
        %s303 = scalar_select %p302, %s24, 0
        %s304 = smul.addr %s301, 4
        %s305 = sadd.s32 %s303, %s304
        %s306 = smul.addr %s305, 4
        %s307 = scalar_lea.vmem %s3, %s306
        %p308 = pneg %p141
        %p309 = pneg %p138
        %s310 = smul.u32 8, %s24
        %p311 = scmp.lt.s32.totalorder %s23, 3
        %s312 = scalar_select %p311, %s23, 3
        %p313 = scmp.lt.s32.totalorder %s310, 7
        %s314 = scalar_select %p313, %s310, 7
        %s315 = smul.addr %s312, 8
        %s316 = sadd.s32 %s314, %s315
        %s317 = smul.addr %s316, 4
        %s318 = scalar_lea.vmem %s4, %s317
        %p319 = pneg %p169
        %p320 = pneg %p166
        %p321 = pneg %p195
        %p322 = pneg %p192
        %p323 = scmp.lt.s32.totalorder %s22, 0
        %s324 = scalar_select %p323, %s22, 0
        %s325 = smul.addr %s324, 4
        %s326 = scalar_lea.vmem %s0, %s325
        %p327 = scmp.lt.s32.totalorder %s23, 3
        %s328 = scalar_select %p327, %s23, 3
        %p329 = scmp.lt.s32.totalorder %s22, 0
        %s330 = scalar_select %p329, %s22, 0
        %s331 = smul.addr %s328, 2
        %s332 = sadd.s32 %s330, %s331
        %s333 = smul.addr %s332, 4
        %s334 = scalar_lea.vmem %s1, %s333
        %p335 = scmp.lt.s32.totalorder %s23, 3
        %s336 = scalar_select %p335, %s23, 3
        %p337 = scmp.lt.s32.totalorder %s22, 0
        %s338 = scalar_select %p337, %s22, 0
        %s339 = smul.addr %s336, 2
        %s340 = sadd.s32 %s338, %s339
        %s341 = smul.addr %s340, 4
        %s342 = scalar_lea.vmem %s2, %s341
        %p343 = scmp.lt.s32.totalorder %s23, 3
        %s344 = scalar_select %p343, %s23, 3
        %p345 = scmp.lt.s32.totalorder %s24, 0
        %s346 = scalar_select %p345, %s24, 0
        %s347 = smul.addr %s344, 4
        %s348 = sadd.s32 %s346, %s347
        %s349 = smul.addr %s348, 4
        %s350 = scalar_lea.vmem %s3, %s349
        %s351 = smul.u32 8, %s24
        %p352 = scmp.lt.s32.totalorder %s23, 3
        %s353 = scalar_select %p352, %s23, 3
        %p354 = scmp.lt.s32.totalorder %s351, 7
        %s355 = scalar_select %p354, %s351, 7
        %s356 = smul.addr %s353, 8
        %s357 = sadd.s32 %s355, %s356
        %s358 = smul.addr %s357, 4
        %s359 = scalar_lea.vmem %s4, %s358
        %s360 = smul.u32 8, %s24
        %p362 = scmp.eq.s32.totalorder %s23, 0
        %p363 = scmp.eq.s32.totalorder %s24, 0
        %p364 = pnand %p362, %p363
        %p365 = pneg %p364
        // Predicated region
        $region41: #{moe_apply.1} parent=39 // pred_check
          _
        $region42: #{moe_apply.1} parent=39 // pred_check_branch
          %367 = sbr.rel (%p364) target = $region44
        $region43: #{moe_apply.1} parent=39 // pred_region
          %vm368 = vcmask 261120
          %369 = vst.msk [vmem:[#allocation2] sm:$0xff] %vm368, 0.0
          %370 = vst.msk [vmem:[#allocation2 + $0x8] sm:$0xff] %vm368, 0.0
        $region44: #{moe_apply.1} parent=39 // pred_fallthru
          _
        // Predicated region
        $region45: #{moe_apply.1} parent=39 // pred_check
          %p371 = pneg %p363
        $region46: #{moe_apply.1} parent=39 // pred_check_branch
          %373 = sbr.rel (%p371) target = $region48
        $region47: #{moe_apply.1} parent=39 // pred_region
          %v374 = vld [vmem:[%s334] sm:$0xf]
          %v375 = vld [vmem:[%s326] sm:$0xf]
          %vm376 = vcmask 64512
          %v378 = vsel %vm376, %v374, 0
          %vm380 = vcmask 1043456
          %v382 = vsel %vm380, %v375, 0
          %384 = vmatpush.bf16.msra.mxu0 0
          %385 = vmatpush.bf16.msra.mxu0 0
          %386 = vmatpush.bf16.msra.mxu0 0
          %387 = vmatpush.bf16.msra.mxu0 0
          %388 = vmatpush.bf16.msra.mxu0 0
          %389 = vmatpush.bf16.msra.mxu0 0
          %390 = vmatpush.bf16.msra.mxu0 0
          %391 = vmatpush.bf16.msra.mxu0 %v382
          %392 = vmatmul.bf16.gmra.mxu0 %v378
          %v393 = vpop.f32.mrf.mxu0
          %v394 = vadd.f32 0.0, %v393
          %v395 = vpop.f32.mrf.mxu0
          %396 = vdwg.mxu0
          %v397 = vpack.c.bf16 %v394, %v394
          %vm398 = vcmask 257024
          %399 = vst.msk [vmem:[#allocation3] sm:$0xf] %vm398, %v397
          %s400 = scalar_lea.vmem %s334, 4
          %v401 = vld [vmem:[%s400] sm:$0xf]
          %s402 = scalar_lea.vmem %s326, 4
          %v403 = vld [vmem:[%s402] sm:$0xf]
          %v405 = vsel %vm376, %v401, 0
          %v408 = vsel %vm380, %v403, 0
          %410 = vmatpush.bf16.msra.mxu0 0
          %411 = vmatpush.bf16.msra.mxu0 0
          %412 = vmatpush.bf16.msra.mxu0 0
          %413 = vmatpush.bf16.msra.mxu0 0
          %414 = vmatpush.bf16.msra.mxu0 0
          %415 = vmatpush.bf16.msra.mxu0 0
          %416 = vmatpush.bf16.msra.mxu0 0
          %417 = vmatpush.bf16.msra.mxu0 %v408
          %418 = vmatmul.bf16.gmra.mxu0 %v405
          %v419 = vpop.f32.mrf.mxu0
          %v420 = vadd.f32 0.0, %v419
          %v421 = vpop.f32.mrf.mxu0
          %422 = vdwg.mxu0
          %v423 = vpack.c.bf16 %v420, %v420
          %424 = vst.msk [vmem:[#allocation3 + $0x4] sm:$0xf] %vm398, %v423
          %vm425 = vcmask 261120
          %426 = vst.msk [vmem:[#allocation4] sm:$0xff] %vm425, 0.0
          %427 = vst.msk [vmem:[#allocation4 + $0x8] sm:$0xff] %vm425, 0.0
        $region48: #{moe_apply.1} parent=39 // pred_fallthru
          _
        %v428 = vld [vmem:[#allocation3] sm:$0xf]
        %v429 = vld [vmem:[#allocation3 + $0x4] sm:$0xf]
        %v430 = vld [vmem:[%s350] sm:$0xf]
        %v431 = vld [vmem:[%s350 + $0x4] sm:$0xf]
        %v432 = vld [vmem:[%s350 + $0x8] sm:$0xf]
        %v433 = vld [vmem:[%s350 + $0xc] sm:$0xf]
        %v436 = vunpack.c.l.b16 %v428
        %v437 = vunpack.c.l.b16 %v429
        %v438 = vpack.c.b16 %v437, %v436
        %v443 = vunpack.c.l.b16 %v430
        %v444 = vunpack.c.l.b16 %v431
        %v445 = vunpack.c.l.b16 %v432
        %v446 = vunpack.c.l.b16 %v433
        %v447 = vpack.c.b16 %v444, %v443
        %v448 = vpack.c.b16 %v446, %v445
        %vm451 = vcmask 261120
        %v453 = vsel %vm451, %v438, 0
        %455 = vmatpush.bf16.msra.mxu0 0
        %456 = vmatpush.bf16.msra.mxu0 0
        %457 = vmatpush.bf16.msra.mxu0 0
        %458 = vmatpush.bf16.msra.mxu0 0
        %459 = vmatpush.bf16.msra.mxu0 0
        %460 = vmatpush.bf16.msra.mxu0 0
        %461 = vmatpush.bf16.msra.mxu0 %v448
        %462 = vmatpush.bf16.msra.mxu0 %v447
        %463 = vmatmul.bf16.gmra.mxu0 %v453
        %v464 = vpop.f32.mrf.mxu0
        %v465 = vadd.f32 0.0, %v464
        %v466 = vpop.f32.mrf.mxu0
        %v467 = vadd.f32 0.0, %v466
        %468 = vdwg.mxu0
        %v469 = vmax.f32 %v465, 0.0
        %v470 = vmax.f32 %v467, 0.0
        %v471 = vld [vmem:[#allocation4] sm:$0xff]
        %v472 = vld [vmem:[#allocation4 + $0x8] sm:$0xff]
        %v473 = vpack.c.bf16 %v470, %v469
        %v474 = vld [vmem:[%s359] sm:$0xf]
        %v475 = vld [vmem:[%s359 + $0x4] sm:$0xf]
        %v476 = vld [vmem:[%s359 + $0x8] sm:$0xf]
        %v477 = vld [vmem:[%s359 + $0xc] sm:$0xf]
        %v478 = vld [vmem:[%s359 + $0x10] sm:$0xf]
        %v479 = vld [vmem:[%s359 + $0x14] sm:$0xf]
        %v480 = vld [vmem:[%s359 + $0x18] sm:$0xf]
        %v481 = vld [vmem:[%s359 + $0x1c] sm:$0xf]
        %v490 = vunpack.c.l.b16 %v474
        %v491 = vunpack.c.l.b16 %v475
        %v492 = vunpack.c.l.b16 %v476
        %v493 = vunpack.c.l.b16 %v477
        %v494 = vunpack.c.l.b16 %v478
        %v495 = vunpack.c.l.b16 %v479
        %v496 = vunpack.c.l.b16 %v480
        %v497 = vunpack.c.l.b16 %v481
        %v498 = vpack.c.b16 %v491, %v490
        %v499 = vpack.c.b16 %v493, %v492
        %v500 = vpack.c.b16 %v495, %v494
        %v501 = vpack.c.b16 %v497, %v496
        %vm506 = vcmask 523264
        %v508 = vsel %vm506, %v473, 0
        %510 = vmatpush.bf16.msra.mxu0 0
        %511 = vmatpush.bf16.msra.mxu0 0
        %512 = vmatpush.bf16.msra.mxu0 0
        %513 = vmatpush.bf16.msra.mxu0 0
        %514 = vmatpush.bf16.msra.mxu0 %v501
        %515 = vmatpush.bf16.msra.mxu0 %v500
        %516 = vmatpush.bf16.msra.mxu0 %v499
        %517 = vmatpush.bf16.msra.mxu0 %v498
        %518 = vmatmul.bf16.gmra.mxu0 %v508
        %v519 = vpop.f32.mrf.mxu0
        %v520 = vadd.f32 0.0, %v519
        %v521 = vpop.f32.mrf.mxu0
        %v522 = vadd.f32 0.0, %v521
        %523 = vdwg.mxu0
        %v524 = vadd.f32 %v471, %v520
        %v525 = vadd.f32 %v472, %v522
        %526 = vst.msk [vmem:[#allocation4] sm:$0xff] %vm451, %v524
        %527 = vst.msk [vmem:[#allocation4 + $0x8] sm:$0xff] %vm451, %v525
        // Predicated region
        $region49: #{moe_apply.1} parent=39 // pred_check
          %p528 = pneg %p363
        $region50: #{moe_apply.1} parent=39 // pred_check_branch
          %530 = sbr.rel (%p528) target = $region52
        $region51: #{moe_apply.1} parent=39 // pred_region
          %v531 = vld [vmem:[#allocation4] sm:$0xff]
          %v532 = vpack.c.bf16 %v531, %v531
          %v533 = vld [vmem:[#allocation2] sm:$0xff]
          %v534 = vld [vmem:[%s342] sm:$0xf]
          %vm535 = vcmask 64512
          %v537 = vsel %vm535, %v534, 0
          %vm539 = vcmask 1043456
          %v541 = vsel %vm539, %v532, 0
          %543 = vmatpush.bf16.msra.mxu0 0
          %544 = vmatpush.bf16.msra.mxu0 0
          %545 = vmatpush.bf16.msra.mxu0 0
          %546 = vmatpush.bf16.msra.mxu0 0
          %547 = vmatpush.bf16.msra.mxu0 0
          %548 = vmatpush.bf16.msra.mxu0 0
          %549 = vmatpush.bf16.msra.mxu0 0
          %550 = vmatpush.bf16.msra.mxu0 %v541
          %551 = vmatmul.bf16.gmra.mxu0 %v537
          %v552 = vpop.f32.mrf.mxu0
          %v553 = vadd.f32 0.0, %v552
          %v554 = vpop.f32.mrf.mxu0
          %555 = vdwg.mxu0
          %v556 = vadd.f32 %v533, %v553
          %557 = vst.msk [vmem:[#allocation2] sm:$0xff] %vm451, %v556
          %v558 = vld [vmem:[#allocation4 + $0x8] sm:$0xff]
          %v559 = vpack.c.bf16 %v558, %v558
          %s560 = scalar_lea.vmem [#allocation2], 8
          %v561 = vld [vmem:[%s560] sm:$0xff]
          %s562 = scalar_lea.vmem %s342, 4
          %v563 = vld [vmem:[%s562] sm:$0xf]
          %v565 = vsel %vm535, %v563, 0
          %v568 = vsel %vm539, %v559, 0
          %570 = vmatpush.bf16.msra.mxu0 0
          %571 = vmatpush.bf16.msra.mxu0 0
          %572 = vmatpush.bf16.msra.mxu0 0
          %573 = vmatpush.bf16.msra.mxu0 0
          %574 = vmatpush.bf16.msra.mxu0 0
          %575 = vmatpush.bf16.msra.mxu0 0
          %576 = vmatpush.bf16.msra.mxu0 0
          %577 = vmatpush.bf16.msra.mxu0 %v568
          %578 = vmatmul.bf16.gmra.mxu0 %v565
          %v579 = vpop.f32.mrf.mxu0
          %v580 = vadd.f32 0.0, %v579
          %v581 = vpop.f32.mrf.mxu0
          %582 = vdwg.mxu0
          %v583 = vadd.f32 %v561, %v580
          %584 = vst.msk [vmem:[%s560] sm:$0xff] %vm451, %v583
        $region52: #{moe_apply.1} parent=39 // pred_fallthru
          _
        %p585 = scmp.eq.s32.totalorder %s23, 3
        %p586 = pnand %p585, %p363
        %p587 = pneg %p586
        // Predicated region
        $region53: #{moe_apply.1} parent=39 // pred_check
          _
        $region54: #{moe_apply.1} parent=39 // pred_check_branch
          %589 = sbr.rel (%p586) target = $region56
        $region55: #{moe_apply.1} parent=39 // pred_region
          %v590 = vld [vmem:[#allocation2] sm:$0xff]
          %v591 = vld [vmem:[#allocation2 + $0x8] sm:$0xff]
          %592 = vst.msk [vmem:[#allocation5] sm:$0xff] %vm451, %v590
          %593 = vst.msk [vmem:[#allocation5 + $0x8] sm:$0xff] %vm451, %v591
        $region56: #{moe_apply.1} parent=39 // pred_fallthru
          _
        // Predicated region
        $region57: #{moe_apply.1} parent=39 // pred_check
          %p594 = pneg %p192
        $region58: #{moe_apply.1} parent=39 // pred_check_branch
          %596 = sbr.rel (%p594) target = $region60
        $region59: #{moe_apply.1} parent=39 // pred_region
          %598 = vsyncadd [#allocation6], 0
          %s599 = smul.addr %s22, 8
          %s600 = scalar_lea.hbm %s5, %s599
          %s601 = sshll.u32 [#allocation5], 4
          %s602 = int_to_ptr.vmem [resolvable:$true] %s601
          %s603 = sshll.u32 %s600, 4
          %s604 = int_to_ptr.hbm [resolvable:$true] %s603
          %609 = dma.vmem_to_hbm [thread:$0]  %s602, 256, %s604, [#allocation6], 128, 128, 8
        $region60: #{moe_apply.1} parent=39 // pred_fallthru
          _
        // Predicated region
        $region61: #{moe_apply.1} parent=39 // pred_check
          %p610 = pneg %p192
        $region62: #{moe_apply.1} parent=39 // pred_check_branch
          %612 = sbr.rel (%p610) target = $region64
        $region63: #{moe_apply.1} parent=39 // pred_region
          %614 = dma.done [#allocation6], 256
        $region64: #{moe_apply.1} parent=39 // pred_fallthru
          _
      $region40: #{moe_apply.1} parent=5 // pred_fallthru
        _
      %p615 = scmp.le.s32.totalorder 2, %s12
      // Predicated region
      $region65: #{moe_apply.1} parent=5 // pred_check
        %p616 = pneg %p615
      $region66: #{moe_apply.1} parent=5 // pred_check_branch
        %618 = sbr.rel (%p616) target = $region68
      $region67: #{moe_apply.1} parent=5 // pred_region
        %s619 = ssub.s32 %s12, 2
      $region68: #{moe_apply.1} parent=5 // pred_fallthru
        _
    $region6: #{moe_apply.1} parent=1 // loop_footer
      %s16 = sadd.s32 1, %s12
    $region7: #{moe_apply.1} parent=1 // loop_footer_branch
      %11 = sbr.rel target = $region3
    $region8: #{moe_apply.1} parent=1 // loop_exit
      _
    %620 = vsyncpa [#allocation6], 1
    %s621 = scalar_lea.sflag [#allocation6], 1
    %622 = vsyncpa %s621, 1

</llo_original>
